<compile_context>
chip_gen: v5e
topology: v5e:2x2
jax: 0.10.0
libtpu: 0.0.40
codegen_flags: <defaults>
</compile_context>

<pallas_src>
import functools

import jax
import jax.numpy as jnp
from jax import lax
from jax.experimental import pallas as pl
from jax.experimental.pallas import tpu as pltpu

LAMBDA_CLASS = 1.0
LAMBDA_NO_OBJ = 10.0
LAMBDA_OBJ = 1.0
LAMBDA_COORD = 10.0

LANE = 128
SUBLANE = 8


def yolo_loss_kernel(anch_ref, preds_ref, target_ref, out_ref):
    """anch_ref: (8, 128) f32, rows = [w, h, 1/w, 1/h] broadcast over lanes;
    preds_ref: (C, TB, 128) in input dtype; target_ref: (6, TB, 128);
    out_ref: (6, 8, 128) f32 per-block partial sums."""
    f32 = jnp.float32
    C, TB, _ = preds_ref.shape
    NC = C - 5

    def fold(x):
        # (TB, 128) -> (8, 128): vreg-aligned static slices, pure VALU adds.
        r = x[0:SUBLANE]
        for k in range(1, TB // SUBLANE):
            r = r + x[k * SUBLANE:(k + 1) * SUBLANE]
        return r

    tconf = target_ref[0].astype(f32)          # (TB, 128)
    obj_b = tconf == 1.0                       # padded cells carry conf = -1 -> neither
    noobj_b = tconf == 0.0

    p_conf = preds_ref[0].astype(f32)          # objectness logits
    # BCE-with-logits, CSE'd: target z is exactly 0 (noobj) or iou (obj, conf==1), so
    #   BCE(x, z) = base - x*z   with   base = max(x, 0) + log1p(exp(-|x|)).
    base = jnp.maximum(p_conf, 0.0) + jnp.log1p(jnp.exp(-jnp.abs(p_conf)))
    zero = jnp.zeros_like(p_conf)

    out_ref[0] = fold(jnp.where(noobj_b, base, zero))     # no-object BCE sum
    out_ref[1] = fold(noobj_b.astype(f32))                 # no-object count

    any_obj = jnp.any(obj_b)

    @pl.when(any_obj)
    def _obj_path():
        anch_w = anch_ref[0:1, :]                          # (1, 128) broadcast rows
        anch_h = anch_ref[1:2, :]
        inv_w = anch_ref[2:3, :]
        inv_h = anch_ref[3:4, :]

        px = jax.nn.sigmoid(preds_ref[1].astype(f32))
        py = jax.nn.sigmoid(preds_ref[2].astype(f32))
        pw_raw = preds_ref[3].astype(f32)
        ph_raw = preds_ref[4].astype(f32)
        pw = jnp.exp(pw_raw) * anch_w
        ph = jnp.exp(ph_raw) * anch_h

        tx = target_ref[1].astype(f32)
        ty = target_ref[2].astype(f32)
        tw = target_ref[3].astype(f32)
        th = target_ref[4].astype(f32)

        # Midpoint IoU without materializing the 8 corner arrays.
        iw = jnp.maximum(jnp.minimum(px + 0.5 * pw, tx + 0.5 * tw)
                         - jnp.maximum(px - 0.5 * pw, tx - 0.5 * tw), 0.0)
        ih = jnp.maximum(jnp.minimum(py + 0.5 * ph, ty + 0.5 * th)
                         - jnp.maximum(py - 0.5 * ph, ty - 0.5 * th), 0.0)
        inter = iw * ih
        union = jnp.abs(pw * ph) + jnp.abs(tw * th) - inter + 1e-6
        ious = inter * pl.reciprocal(union, approx=True)

        # Object BCE vs (iou * conf): on obj cells conf == 1 -> base - x*iou.
        out_ref[2] = fold(jnp.where(obj_b, base - p_conf * ious, zero))
        out_ref[3] = fold(obj_b.astype(f32))

        # Coordinate squared error (4 coords per obj cell).
        d_x = px - tx
        d_y = py - ty
        d_w = pw_raw - jnp.log(1e-16 + tw * inv_w)
        d_h = ph_raw - jnp.log(1e-16 + th * inv_h)
        coord_sq = d_x * d_x + d_y * d_y + d_w * d_w + d_h * d_h
        out_ref[4] = fold(jnp.where(obj_b, coord_sq, zero))

        # Class cross-entropy: streamed two-pass logsumexp over the NC class channels.
        cls_idx = target_ref[5].astype(f32)

        def max_body(c, m):
            return jnp.maximum(m, preds_ref[5 + c].astype(f32))

        m = lax.fori_loop(0, NC, max_body,
                          jnp.full((TB, LANE), -jnp.inf, f32))

        def sum_body(c, carry):
            s, picked = carry
            lg = preds_ref[5 + c].astype(f32)
            s = s + jnp.exp(lg - m)
            picked = picked + jnp.where(cls_idx == c.astype(f32), lg, zero)
            return s, picked

        s, picked = lax.fori_loop(
            0, NC, sum_body,
            (jnp.zeros((TB, LANE), f32), jnp.zeros((TB, LANE), f32)))
        ce = m + jnp.log(s) - picked
        out_ref[5] = fold(jnp.where(obj_b, ce, zero))

    @pl.when(jnp.logical_not(any_obj))
    def _empty_tile():
        z8 = jnp.zeros((SUBLANE, LANE), jnp.float32)
        out_ref[2] = z8
        out_ref[3] = z8
        out_ref[4] = z8
        out_ref[5] = z8


def _round_up(x, m):
    return -(-x // m) * m


@functools.partial(jax.jit, static_argnames=("tb_rows",))
def yolo_loss_pallas(preds, target, anchors, *, tb_rows=128):
    """preds: (N, A, S, S, 5+NC), target: (N, A, S, S, 6), anchors: (A, 2)."""
    N, A, S, _, C = preds.shape
    P = N * S * S                                        # cells per anchor
    rows = _round_up(P, LANE) // LANE                    # 128-cell rows needed
    rows8 = _round_up(rows, SUBLANE)                     # keep sublane fold exact
    TB = min(max(SUBLANE, (tb_rows // SUBLANE) * SUBLANE), rows8)
    nblk = _round_up(rows8, TB) // TB
    Mb = nblk * TB
    Ppad = Mb * LANE
    grid = (A, nblk)

    # Channel-major, anchor-major, lane-dense layout (no dtype up-cast: bf16 heads keep
    # bf16 HBM traffic; compute is f32 in-kernel).
    # TODO(synk): this transpose is one extra HBM round trip of preds; ideally the
    # detection head emits (A, C, cells) directly.
    preds_t = jnp.transpose(preds, (1, 4, 0, 2, 3)).reshape(A, C, P)
    target_t = jnp.transpose(target, (1, 4, 0, 2, 3)).reshape(A, 6, P)

    pad = Ppad - P
    if pad:
        preds_t = jnp.pad(preds_t, ((0, 0), (0, 0), (0, pad)))
        target_t = jnp.pad(target_t, ((0, 0), (0, 0), (0, pad)))
        # Padded cells: conf = -1 -> neither obj nor noobj -> excluded from every sum.
        pad_mask = jnp.arange(Ppad) >= P
        target_t = target_t.at[:, 0, :].set(
            jnp.where(pad_mask, jnp.asarray(-1.0, target_t.dtype), target_t[:, 0, :]))

    preds_t = preds_t.reshape(A, C, Mb, LANE)
    target_t = target_t.reshape(A, 6, Mb, LANE)

    # Tiny per-anchor constant table, broadcast over lanes: rows [w, h, 1/w, 1/h].
    anchors_f = anchors.astype(jnp.float32)
    vals = jnp.stack([anchors_f[:, 0], anchors_f[:, 1],
                      1.0 / anchors_f[:, 0], 1.0 / anchors_f[:, 1]], axis=-1)  # (A, 4)
    anch = jnp.zeros((A, SUBLANE, LANE), jnp.float32)
    anch = anch.at[:, :4, :].set(vals[:, :, None])

    # Explicit VMEM budget: double-buffered input blocks + output block + anchors.
    block_bytes = (C * TB * LANE * preds_t.dtype.itemsize
                   + 6 * TB * LANE * target_t.dtype.itemsize
                   + 6 * SUBLANE * LANE * 4
                   + SUBLANE * LANE * 4)
    vmem_limit = max(2 * block_bytes + (8 << 20), 16 << 20)

    partials = pl.pallas_call(
        yolo_loss_kernel,
        out_shape=jax.ShapeDtypeStruct((A * nblk, 6, SUBLANE, LANE), jnp.float32),
        grid=grid,
        in_specs=[
            pl.BlockSpec((None, SUBLANE, LANE), lambda a, i: (a, 0, 0)),    # anchors
            pl.BlockSpec((None, C, TB, LANE), lambda a, i: (a, 0, i, 0)),   # preds tile
            pl.BlockSpec((None, 6, TB, LANE), lambda a, i: (a, 0, i, 0)),   # target tile
        ],
        out_specs=pl.BlockSpec((None, 6, SUBLANE, LANE),
                               lambda a, i: (a * nblk + i, 0, 0, 0)),
        compiler_params=pltpu.CompilerParams(
            dimension_semantics=("parallel", "parallel"),
            vmem_limit_bytes=int(vmem_limit),
            allow_input_fusion=[False, True, True]),
    )(anch, preds_t, target_t)

    sums = jnp.sum(partials, axis=(0, 2, 3))             # (6,)
    noobj_sum, noobj_cnt = sums[0], sums[1]
    obj_sum, obj_cnt = sums[2], sums[3]
    coord_sum, class_sum = sums[4], sums[5]
    # NOTE: like PyTorch, a batch with zero obj (or noobj) cells divides by zero here.
    return (LAMBDA_COORD * coord_sum / (4.0 * obj_cnt)
            + LAMBDA_OBJ * obj_sum / obj_cnt
            + LAMBDA_NO_OBJ * noobj_sum / noobj_cnt
            + LAMBDA_CLASS * class_sum / obj_cnt)


def yolo_loss_ref(preds, target, anchors):
    """Pure-JAX reference mirroring the PyTorch forward (concrete arrays only)."""
    preds = preds.astype(jnp.float32)
    target = target.astype(jnp.float32)
    obj = target[..., 0] == 1
    noobj = target[..., 0] == 0

    def bce_mean(x, z):
        return jnp.mean(jnp.maximum(x, 0.0) - x * z + jnp.log(1.0 + jnp.exp(-jnp.abs(x))))

    no_obj_loss = bce_mean(preds[..., 0:1][noobj], target[..., 0:1][noobj])

    a = anchors.reshape(1, anchors.shape[0], 1, 1, 2)
    box_preds = jnp.concatenate(
        [jax.nn.sigmoid(preds[..., 1:3]), jnp.exp(preds[..., 3:5]) * a], axis=-1)
    bp = box_preds[obj]
    bt = target[..., 1:5][obj]
    p_x1, p_y1 = bp[:, 0:1] - bp[:, 2:3] / 2, bp[:, 1:2] - bp[:, 3:4] / 2
    p_x2, p_y2 = bp[:, 0:1] + bp[:, 2:3] / 2, bp[:, 1:2] + bp[:, 3:4] / 2
    t_x1, t_y1 = bt[:, 0:1] - bt[:, 2:3] / 2, bt[:, 1:2] - bt[:, 3:4] / 2
    t_x2, t_y2 = bt[:, 0:1] + bt[:, 2:3] / 2, bt[:, 1:2] + bt[:, 3:4] / 2
    inter = (jnp.clip(jnp.minimum(p_x2, t_x2) - jnp.maximum(p_x1, t_x1), 0)
             * jnp.clip(jnp.minimum(p_y2, t_y2) - jnp.maximum(p_y1, t_y1), 0))
    area_p = jnp.abs((p_x2 - p_x1) * (p_y2 - p_y1))
    area_t = jnp.abs((t_x2 - t_x1) * (t_y2 - t_y1))
    ious = inter / (area_p + area_t - inter + 1e-6)

    object_loss = bce_mean(preds[..., 0:1][obj], ious * target[..., 0:1][obj])

    p15 = jnp.concatenate([jax.nn.sigmoid(preds[..., 1:3]), preds[..., 3:5]], axis=-1)
    t15 = jnp.concatenate([target[..., 1:3], jnp.log(1e-16 + target[..., 3:5] / a)], axis=-1)
    coord_loss = jnp.mean((p15[obj] - t15[obj]) ** 2)

    logits = preds[..., 5:][obj]
    cls = target[..., 5][obj].astype(jnp.int32)
    lse = jax.scipy.special.logsumexp(logits, axis=-1)
    picked = jnp.take_along_axis(logits, cls[:, None], axis=-1)[:, 0]
    class_loss = jnp.mean(lse - picked)

    return (LAMBDA_COORD * coord_loss + LAMBDA_OBJ * object_loss
            + LAMBDA_NO_OBJ * no_obj_loss + LAMBDA_CLASS * class_loss)


if __name__ == "__main__":
    key = jax.random.PRNGKey(0)

    def make_inputs(k, N, A, S, NC):
        C = 5 + NC
        k_p, k_c, k_xy, k_wh, k_cls = jax.random.split(k, 5)
        preds = jax.random.normal(k_p, (N, A, S, S, C), dtype=jnp.float32)
        conf = (jax.random.uniform(k_c, (N, A, S, S, 1)) > 0.7).astype(jnp.float32)
        xy = jax.random.uniform(k_xy, (N, A, S, S, 2), minval=0.05, maxval=0.95)
        wh = jax.random.uniform(k_wh, (N, A, S, S, 2), minval=0.5, maxval=2.0)
        cls = jax.random.randint(k_cls, (N, A, S, S, 1), 0, NC).astype(jnp.float32)
        target = jnp.concatenate([conf, xy, wh, cls], axis=-1)     # (N, A, S, S, 6)
        return preds, target

    anchors = jnp.array([[0.9, 0.8], [0.5, 0.4], [0.2, 0.3]], dtype=jnp.float32)

    cases = [
        dict(N=2, A=3, S=8, NC=4, tb_rows=128),   # single block/anchor + heavy cell padding
        dict(N=2, A=3, S=13, NC=4, tb_rows=128),  # non-multiple-of-128 cell count
        dict(N=2, A=3, S=32, NC=4, tb_rows=8),    # multi-block grid per anchor, no padding
    ]
    keys = jax.random.split(key, len(cases))
    for cfg, k in zip(cases, keys):
        preds, target = make_inputs(k, cfg["N"], cfg["A"], cfg["S"], cfg["NC"])
        loss = jax.block_until_ready(
            yolo_loss_pallas(preds, target, anchors, tb_rows=cfg["tb_rows"]))
        ref = yolo_loss_ref(preds, target, anchors)
        assert jnp.isfinite(loss), f"non-finite loss: {loss} (cfg={cfg})"
        assert jnp.allclose(loss, ref, rtol=2e-3, atol=2e-3), \
            f"mismatch (cfg={cfg}): {loss} vs {ref}"
    print("KERNEL_OK")
</pallas_src>

<mosaic_0001>
module attributes {stable_mosaic.version = 11 : i64} {
  func.func @yolo_loss_kernel(%arg0: i32, %arg1: i32, %arg2: memref<1x8x128xf32, #tpu.memory_space<vmem>>, %arg3: memref<1x9x8x128xf32, #tpu.memory_space<vmem>>, %arg4: memref<1x6x8x128xf32, #tpu.memory_space<vmem>>, %arg5: memref<1x6x8x128xf32, #tpu.memory_space<vmem>>) attributes {dimension_semantics = [#tpu.dimension_semantics<parallel>, #tpu.dimension_semantics<parallel>], iteration_bounds = array<i64: 3, 1>, scalar_prefetch = 0 : i64, scratch_operands = 0 : i64, tpu.core_type = #tpu.core_type<tc>, window_params = [{transform_indices = @transform_0, window_bounds = array<i64: 1, 8, 128>}, {transform_indices = @transform_1, window_bounds = array<i64: 1, 9, 8, 128>}, {transform_indices = @transform_2, window_bounds = array<i64: 1, 6, 8, 128>}, {transform_indices = @transform_3, window_bounds = array<i64: 1, 6, 8, 128>}]} {
    %c0 = arith.constant 0 : index
    %c0_0 = arith.constant 0 : index
    %c0_1 = arith.constant 0 : index
    %c0_2 = arith.constant 0 : index
    %0 = vector.load %arg4[%c0, %c0_0, %c0_1, %c0_2] : memref<1x6x8x128xf32, #tpu.memory_space<vmem>>, vector<1x1x8x128xf32>
    %1 = vector.shape_cast %0 : vector<1x1x8x128xf32> to vector<8x128xf32>
    %cst = arith.constant 1.000000e+00 : f32
    %2 = vector.broadcast %cst : f32 to vector<8x128xf32>
    %3 = arith.cmpf oeq, %1, %2 : vector<8x128xf32>
    %cst_3 = arith.constant 0.000000e+00 : f32
    %4 = vector.broadcast %cst_3 : f32 to vector<8x128xf32>
    %5 = arith.cmpf oeq, %1, %4 : vector<8x128xf32>
    %c0_4 = arith.constant 0 : index
    %c0_5 = arith.constant 0 : index
    %c0_6 = arith.constant 0 : index
    %c0_7 = arith.constant 0 : index
    %6 = vector.load %arg3[%c0_4, %c0_5, %c0_6, %c0_7] : memref<1x9x8x128xf32, #tpu.memory_space<vmem>>, vector<1x1x8x128xf32>
    %7 = vector.shape_cast %6 : vector<1x1x8x128xf32> to vector<8x128xf32>
    %cst_8 = arith.constant 0.000000e+00 : f32
    %8 = vector.broadcast %cst_8 : f32 to vector<8x128xf32>
    %9 = arith.maximumf %7, %8 : vector<8x128xf32>
    %10 = math.absf %7 : vector<8x128xf32>
    %cst_9 = arith.constant 0.000000e+00 : f32
    %11 = vector.broadcast %cst_9 : f32 to vector<8x128xf32>
    %12 = arith.subf %11, %10 : vector<8x128xf32>
    %13 = math.exp %12 : vector<8x128xf32>
    %14 = math.log1p %13 : vector<8x128xf32>
    %15 = arith.addf %9, %14 : vector<8x128xf32>
    %cst_10 = arith.constant 0.000000e+00 : f32
    %16 = vector.broadcast %cst_10 : f32 to vector<8x128xf32>
    %17 = arith.select %5, %15, %16 : vector<8x128xi1>, vector<8x128xf32>
    %c0_11 = arith.constant 0 : index
    %c0_12 = arith.constant 0 : index
    %c0_13 = arith.constant 0 : index
    %c0_14 = arith.constant 0 : index
    %18 = vector.load %arg5[%c0_11, %c0_12, %c0_13, %c0_14] : memref<1x6x8x128xf32, #tpu.memory_space<vmem>>, vector<1x1x8x128xf32>
    %19 = vector.shape_cast %18 : vector<1x1x8x128xf32> to vector<8x128xf32>
    %20 = vector.shape_cast %17 : vector<8x128xf32> to vector<1x1x8x128xf32>
    tpu.vector_store %arg5[%c0_11, %c0_12, %c0_13, %c0_14], %20 {strides = array<i32>} : memref<1x6x8x128xf32, #tpu.memory_space<vmem>>, vector<1x1x8x128xf32>,
    %21 = arith.extui %5 : vector<8x128xi1> to vector<8x128xi32>
    %22 = arith.sitofp %21 : vector<8x128xi32> to vector<8x128xf32>
    %c0_15 = arith.constant 0 : index
    %c1 = arith.constant 1 : index
    %c0_16 = arith.constant 0 : index
    %c0_17 = arith.constant 0 : index
    %23 = vector.load %arg5[%c0_15, %c1, %c0_16, %c0_17] : memref<1x6x8x128xf32, #tpu.memory_space<vmem>>, vector<1x1x8x128xf32>
    %24 = vector.shape_cast %23 : vector<1x1x8x128xf32> to vector<8x128xf32>
    %25 = vector.shape_cast %22 : vector<8x128xf32> to vector<1x1x8x128xf32>
    tpu.vector_store %arg5[%c0_15, %c1, %c0_16, %c0_17], %25 {strides = array<i32>} : memref<1x6x8x128xf32, #tpu.memory_space<vmem>>, vector<1x1x8x128xf32>,
    %cst_18 = arith.constant 1.000000e+00 : f32
    %cst_19 = arith.constant 0.000000e+00 : f32
    %26 = vector.broadcast %cst_18 : f32 to vector<8x128xf32>
    %27 = vector.broadcast %cst_19 : f32 to vector<8x128xf32>
    %28 = arith.select %3, %26, %27 : vector<8x128xi1>, vector<8x128xf32>
    %29 = vector.shape_cast %28 : vector<8x128xf32> to vector<1x8x128xf32>
    %cst_20 = arith.constant dense<0xFF800000> : vector<1xf32>
    %30 = vector.multi_reduction <maximumf>, %29, %cst_20 [1, 2] : vector<1x8x128xf32> to vector<1xf32>
    %31 = vector.shape_cast %30 : vector<1xf32> to vector<1x1x1xf32>
    %32 = vector.extract %31[0, 0, 0] : f32 from vector<1x1x1xf32>
    %cst_21 = arith.constant 0.000000e+00 : f32
    %33 = arith.cmpf ogt, %32, %cst_21 : f32
    %34 = arith.extui %33 : i1 to i32
    %c0_i32 = arith.constant 0 : i32
    %35 = arith.cmpi ne, %34, %c0_i32 : i32
    scf.if %35 {
      %c0_23 = arith.constant 0 : index
      %c0_24 = arith.constant 0 : index
      %c0_25 = arith.constant 0 : index
      %39 = vector.load %arg2[%c0_23, %c0_24, %c0_25] : memref<1x8x128xf32, #tpu.memory_space<vmem>>, vector<1x1x128xf32>
      %40 = vector.shape_cast %39 : vector<1x1x128xf32> to vector<1x128xf32>
      %c0_26 = arith.constant 0 : index
      %c1_27 = arith.constant 1 : index
      %c0_28 = arith.constant 0 : index
      %41 = vector.load %arg2[%c0_26, %c1_27, %c0_28] : memref<1x8x128xf32, #tpu.memory_space<vmem>>, vector<1x1x128xf32>
      %42 = vector.shape_cast %41 : vector<1x1x128xf32> to vector<1x128xf32>
      %c0_29 = arith.constant 0 : index
      %c2 = arith.constant 2 : index
      %c0_30 = arith.constant 0 : index
      %43 = vector.load %arg2[%c0_29, %c2, %c0_30] : memref<1x8x128xf32, #tpu.memory_space<vmem>>, vector<1x1x128xf32>
      %44 = vector.shape_cast %43 : vector<1x1x128xf32> to vector<1x128xf32>
      %c0_31 = arith.constant 0 : index
      %c3 = arith.constant 3 : index
      %c0_32 = arith.constant 0 : index
      %45 = vector.load %arg2[%c0_31, %c3, %c0_32] : memref<1x8x128xf32, #tpu.memory_space<vmem>>, vector<1x1x128xf32>
      %46 = vector.shape_cast %45 : vector<1x1x128xf32> to vector<1x128xf32>
      %c0_33 = arith.constant 0 : index
      %c1_34 = arith.constant 1 : index
      %c0_35 = arith.constant 0 : index
      %c0_36 = arith.constant 0 : index
      %47 = vector.load %arg3[%c0_33, %c1_34, %c0_35, %c0_36] : memref<1x9x8x128xf32, #tpu.memory_space<vmem>>, vector<1x1x8x128xf32>
      %48 = vector.shape_cast %47 : vector<1x1x8x128xf32> to vector<8x128xf32>
      %49 = arith.negf %48 : vector<8x128xf32>
      %50 = math.exp %49 : vector<8x128xf32>
      %cst_37 = arith.constant 1.000000e+00 : f32
      %51 = vector.broadcast %cst_37 : f32 to vector<8x128xf32>
      %52 = arith.addf %51, %50 : vector<8x128xf32>
      %53 = arith.divf %51, %52 : vector<8x128xf32>
      %c0_38 = arith.constant 0 : index
      %c2_39 = arith.constant 2 : index
      %c0_40 = arith.constant 0 : index
      %c0_41 = arith.constant 0 : index
      %54 = vector.load %arg3[%c0_38, %c2_39, %c0_40, %c0_41] : memref<1x9x8x128xf32, #tpu.memory_space<vmem>>, vector<1x1x8x128xf32>
      %55 = vector.shape_cast %54 : vector<1x1x8x128xf32> to vector<8x128xf32>
      %56 = arith.negf %55 : vector<8x128xf32>
      %57 = math.exp %56 : vector<8x128xf32>
      %cst_42 = arith.constant 1.000000e+00 : f32
      %58 = vector.broadcast %cst_42 : f32 to vector<8x128xf32>
      %59 = arith.addf %58, %57 : vector<8x128xf32>
      %60 = arith.divf %58, %59 : vector<8x128xf32>
      %c0_43 = arith.constant 0 : index
      %c3_44 = arith.constant 3 : index
      %c0_45 = arith.constant 0 : index
      %c0_46 = arith.constant 0 : index
      %61 = vector.load %arg3[%c0_43, %c3_44, %c0_45, %c0_46] : memref<1x9x8x128xf32, #tpu.memory_space<vmem>>, vector<1x1x8x128xf32>
      %62 = vector.shape_cast %61 : vector<1x1x8x128xf32> to vector<8x128xf32>
      %c0_47 = arith.constant 0 : index
      %c4 = arith.constant 4 : index
      %c0_48 = arith.constant 0 : index
      %c0_49 = arith.constant 0 : index
      %63 = vector.load %arg3[%c0_47, %c4, %c0_48, %c0_49] : memref<1x9x8x128xf32, #tpu.memory_space<vmem>>, vector<1x1x8x128xf32>
      %64 = vector.shape_cast %63 : vector<1x1x8x128xf32> to vector<8x128xf32>
      %65 = math.exp %62 : vector<8x128xf32>
      %66 = vector.broadcast %40 : vector<1x128xf32> to vector<8x128xf32>
      %67 = arith.mulf %65, %66 : vector<8x128xf32>
      %68 = math.exp %64 : vector<8x128xf32>
      %69 = vector.broadcast %42 : vector<1x128xf32> to vector<8x128xf32>
      %70 = arith.mulf %68, %69 : vector<8x128xf32>
      %c0_50 = arith.constant 0 : index
      %c1_51 = arith.constant 1 : index
      %c0_52 = arith.constant 0 : index
      %c0_53 = arith.constant 0 : index
      %71 = vector.load %arg4[%c0_50, %c1_51, %c0_52, %c0_53] : memref<1x6x8x128xf32, #tpu.memory_space<vmem>>, vector<1x1x8x128xf32>
      %72 = vector.shape_cast %71 : vector<1x1x8x128xf32> to vector<8x128xf32>
      %c0_54 = arith.constant 0 : index
      %c2_55 = arith.constant 2 : index
      %c0_56 = arith.constant 0 : index
      %c0_57 = arith.constant 0 : index
      %73 = vector.load %arg4[%c0_54, %c2_55, %c0_56, %c0_57] : memref<1x6x8x128xf32, #tpu.memory_space<vmem>>, vector<1x1x8x128xf32>
      %74 = vector.shape_cast %73 : vector<1x1x8x128xf32> to vector<8x128xf32>
      %c0_58 = arith.constant 0 : index
      %c3_59 = arith.constant 3 : index
      %c0_60 = arith.constant 0 : index
      %c0_61 = arith.constant 0 : index
      %75 = vector.load %arg4[%c0_58, %c3_59, %c0_60, %c0_61] : memref<1x6x8x128xf32, #tpu.memory_space<vmem>>, vector<1x1x8x128xf32>
      %76 = vector.shape_cast %75 : vector<1x1x8x128xf32> to vector<8x128xf32>
      %c0_62 = arith.constant 0 : index
      %c4_63 = arith.constant 4 : index
      %c0_64 = arith.constant 0 : index
      %c0_65 = arith.constant 0 : index
      %77 = vector.load %arg4[%c0_62, %c4_63, %c0_64, %c0_65] : memref<1x6x8x128xf32, #tpu.memory_space<vmem>>, vector<1x1x8x128xf32>
      %78 = vector.shape_cast %77 : vector<1x1x8x128xf32> to vector<8x128xf32>
      %cst_66 = arith.constant 5.000000e-01 : f32
      %79 = vector.broadcast %cst_66 : f32 to vector<8x128xf32>
      %80 = arith.mulf %79, %67 : vector<8x128xf32>
      %81 = arith.addf %53, %80 : vector<8x128xf32>
      %cst_67 = arith.constant 5.000000e-01 : f32
      %82 = vector.broadcast %cst_67 : f32 to vector<8x128xf32>
      %83 = arith.mulf %82, %76 : vector<8x128xf32>
      %84 = arith.addf %72, %83 : vector<8x128xf32>
      %85 = arith.minimumf %81, %84 : vector<8x128xf32>
      %cst_68 = arith.constant 5.000000e-01 : f32
      %86 = vector.broadcast %cst_68 : f32 to vector<8x128xf32>
      %87 = arith.mulf %86, %67 : vector<8x128xf32>
      %88 = arith.subf %53, %87 : vector<8x128xf32>
      %cst_69 = arith.constant 5.000000e-01 : f32
      %89 = vector.broadcast %cst_69 : f32 to vector<8x128xf32>
      %90 = arith.mulf %89, %76 : vector<8x128xf32>
      %91 = arith.subf %72, %90 : vector<8x128xf32>
      %92 = arith.maximumf %88, %91 : vector<8x128xf32>
      %93 = arith.subf %85, %92 : vector<8x128xf32>
      %cst_70 = arith.constant 0.000000e+00 : f32
      %94 = vector.broadcast %cst_70 : f32 to vector<8x128xf32>
      %95 = arith.maximumf %93, %94 : vector<8x128xf32>
      %cst_71 = arith.constant 5.000000e-01 : f32
      %96 = vector.broadcast %cst_71 : f32 to vector<8x128xf32>
      %97 = arith.mulf %96, %70 : vector<8x128xf32>
      %98 = arith.addf %60, %97 : vector<8x128xf32>
      %cst_72 = arith.constant 5.000000e-01 : f32
      %99 = vector.broadcast %cst_72 : f32 to vector<8x128xf32>
      %100 = arith.mulf %99, %78 : vector<8x128xf32>
      %101 = arith.addf %74, %100 : vector<8x128xf32>
      %102 = arith.minimumf %98, %101 : vector<8x128xf32>
      %cst_73 = arith.constant 5.000000e-01 : f32
      %103 = vector.broadcast %cst_73 : f32 to vector<8x128xf32>
      %104 = arith.mulf %103, %70 : vector<8x128xf32>
      %105 = arith.subf %60, %104 : vector<8x128xf32>
      %cst_74 = arith.constant 5.000000e-01 : f32
      %106 = vector.broadcast %cst_74 : f32 to vector<8x128xf32>
      %107 = arith.mulf %106, %78 : vector<8x128xf32>
      %108 = arith.subf %74, %107 : vector<8x128xf32>
      %109 = arith.maximumf %105, %108 : vector<8x128xf32>
      %110 = arith.subf %102, %109 : vector<8x128xf32>
      %cst_75 = arith.constant 0.000000e+00 : f32
      %111 = vector.broadcast %cst_75 : f32 to vector<8x128xf32>
      %112 = arith.maximumf %110, %111 : vector<8x128xf32>
      %113 = arith.mulf %95, %112 : vector<8x128xf32>
      %114 = arith.mulf %67, %70 : vector<8x128xf32>
      %115 = math.absf %114 : vector<8x128xf32>
      %116 = arith.mulf %76, %78 : vector<8x128xf32>
      %117 = math.absf %116 : vector<8x128xf32>
      %118 = arith.addf %115, %117 : vector<8x128xf32>
      %119 = arith.subf %118, %113 : vector<8x128xf32>
      %cst_76 = arith.constant 9.99999997E-7 : f32
      %120 = vector.broadcast %cst_76 : f32 to vector<8x128xf32>
      %121 = arith.addf %119, %120 : vector<8x128xf32>
      %122 = tpu.reciprocal %121 {approx = true} : vector<8x128xf32> -> vector<8x128xf32>
      %123 = arith.mulf %113, %122 : vector<8x128xf32>
      %124 = arith.mulf %7, %123 : vector<8x128xf32>
      %125 = arith.subf %15, %124 : vector<8x128xf32>
      %126 = arith.select %3, %125, %16 : vector<8x128xi1>, vector<8x128xf32>
      %c0_77 = arith.constant 0 : index
      %c2_78 = arith.constant 2 : index
      %c0_79 = arith.constant 0 : index
      %c0_80 = arith.constant 0 : index
      %127 = vector.load %arg5[%c0_77, %c2_78, %c0_79, %c0_80] : memref<1x6x8x128xf32, #tpu.memory_space<vmem>>, vector<1x1x8x128xf32>
      %128 = vector.shape_cast %127 : vector<1x1x8x128xf32> to vector<8x128xf32>
      %129 = vector.shape_cast %126 : vector<8x128xf32> to vector<1x1x8x128xf32>
      tpu.vector_store %arg5[%c0_77, %c2_78, %c0_79, %c0_80], %129 {strides = array<i32>} : memref<1x6x8x128xf32, #tpu.memory_space<vmem>>, vector<1x1x8x128xf32>,
      %130 = arith.extui %3 : vector<8x128xi1> to vector<8x128xi32>
      %131 = arith.sitofp %130 : vector<8x128xi32> to vector<8x128xf32>
      %c0_81 = arith.constant 0 : index
      %c3_82 = arith.constant 3 : index
      %c0_83 = arith.constant 0 : index
      %c0_84 = arith.constant 0 : index
      %132 = vector.load %arg5[%c0_81, %c3_82, %c0_83, %c0_84] : memref<1x6x8x128xf32, #tpu.memory_space<vmem>>, vector<1x1x8x128xf32>
      %133 = vector.shape_cast %132 : vector<1x1x8x128xf32> to vector<8x128xf32>
      %134 = vector.shape_cast %131 : vector<8x128xf32> to vector<1x1x8x128xf32>
      tpu.vector_store %arg5[%c0_81, %c3_82, %c0_83, %c0_84], %134 {strides = array<i32>} : memref<1x6x8x128xf32, #tpu.memory_space<vmem>>, vector<1x1x8x128xf32>,
      %135 = arith.subf %53, %72 : vector<8x128xf32>
      %136 = arith.subf %60, %74 : vector<8x128xf32>
      %137 = vector.broadcast %44 : vector<1x128xf32> to vector<8x128xf32>
      %138 = arith.mulf %76, %137 : vector<8x128xf32>
      %cst_85 = arith.constant 1.000000e-16 : f32
      %139 = vector.broadcast %cst_85 : f32 to vector<8x128xf32>
      %140 = arith.addf %139, %138 : vector<8x128xf32>
      %141 = math.log %140 : vector<8x128xf32>
      %142 = arith.subf %62, %141 : vector<8x128xf32>
      %143 = vector.broadcast %46 : vector<1x128xf32> to vector<8x128xf32>
      %144 = arith.mulf %78, %143 : vector<8x128xf32>
      %cst_86 = arith.constant 1.000000e-16 : f32
      %145 = vector.broadcast %cst_86 : f32 to vector<8x128xf32>
      %146 = arith.addf %145, %144 : vector<8x128xf32>
      %147 = math.log %146 : vector<8x128xf32>
      %148 = arith.subf %64, %147 : vector<8x128xf32>
      %149 = arith.mulf %135, %135 : vector<8x128xf32>
      %150 = arith.mulf %136, %136 : vector<8x128xf32>
      %151 = arith.addf %149, %150 : vector<8x128xf32>
      %152 = arith.mulf %142, %142 : vector<8x128xf32>
      %153 = arith.addf %151, %152 : vector<8x128xf32>
      %154 = arith.mulf %148, %148 : vector<8x128xf32>
      %155 = arith.addf %153, %154 : vector<8x128xf32>
      %156 = arith.select %3, %155, %16 : vector<8x128xi1>, vector<8x128xf32>
      %c0_87 = arith.constant 0 : index
      %c4_88 = arith.constant 4 : index
      %c0_89 = arith.constant 0 : index
      %c0_90 = arith.constant 0 : index
      %157 = vector.load %arg5[%c0_87, %c4_88, %c0_89, %c0_90] : memref<1x6x8x128xf32, #tpu.memory_space<vmem>>, vector<1x1x8x128xf32>
      %158 = vector.shape_cast %157 : vector<1x1x8x128xf32> to vector<8x128xf32>
      %159 = vector.shape_cast %156 : vector<8x128xf32> to vector<1x1x8x128xf32>
      tpu.vector_store %arg5[%c0_87, %c4_88, %c0_89, %c0_90], %159 {strides = array<i32>} : memref<1x6x8x128xf32, #tpu.memory_space<vmem>>, vector<1x1x8x128xf32>,
      %c0_91 = arith.constant 0 : index
      %c5 = arith.constant 5 : index
      %c0_92 = arith.constant 0 : index
      %c0_93 = arith.constant 0 : index
      %160 = vector.load %arg4[%c0_91, %c5, %c0_92, %c0_93] : memref<1x6x8x128xf32, #tpu.memory_space<vmem>>, vector<1x1x8x128xf32>
      %161 = vector.shape_cast %160 : vector<1x1x8x128xf32> to vector<8x128xf32>
      %cst_94 = arith.constant 0xFF800000 : f32
      %162 = vector.broadcast %cst_94 : f32 to vector<8x128xf32>
      %c0_i32_95 = arith.constant 0 : i32
      %c4_i32 = arith.constant 4 : i32
      %163 = arith.addi %c0_i32_95, %c4_i32 : i32
      %c1_i32 = arith.constant 1 : i32
      %164 = scf.for %arg6 = %c0_i32_95 to %163 step %c1_i32 iter_args(%arg7 = %162) -> (vector<8x128xf32>)  : i32 {
        %c5_i32 = arith.constant 5 : i32
        %176 = arith.addi %c5_i32, %arg6 : i32
        %c0_107 = arith.constant 0 : index
        %177 = arith.index_cast %176 : i32 to index
        %c0_108 = arith.constant 0 : index
        %c0_109 = arith.constant 0 : index
        %178 = vector.load %arg3[%c0_107, %177, %c0_108, %c0_109] : memref<1x9x8x128xf32, #tpu.memory_space<vmem>>, vector<1x1x8x128xf32>
        %179 = vector.shape_cast %178 : vector<1x1x8x128xf32> to vector<8x128xf32>
        %180 = arith.maximumf %arg7, %179 : vector<8x128xf32>
        scf.yield %180 : vector<8x128xf32>
      }
      %c4_i32_96 = arith.constant 4 : i32
      %cst_97 = arith.constant 0.000000e+00 : f32
      %165 = vector.broadcast %cst_97 : f32 to vector<8x128xf32>
      %cst_98 = arith.constant 0.000000e+00 : f32
      %166 = vector.broadcast %cst_98 : f32 to vector<8x128xf32>
      %c0_i32_99 = arith.constant 0 : i32
      %c4_i32_100 = arith.constant 4 : i32
      %167 = arith.addi %c0_i32_99, %c4_i32_100 : i32
      %c1_i32_101 = arith.constant 1 : i32
      %168:2 = scf.for %arg6 = %c0_i32_99 to %167 step %c1_i32_101 iter_args(%arg7 = %165, %arg8 = %166) -> (vector<8x128xf32>, vector<8x128xf32>)  : i32 {
        %c5_i32 = arith.constant 5 : i32
        %176 = arith.addi %c5_i32, %arg6 : i32
        %c0_107 = arith.constant 0 : index
        %177 = arith.index_cast %176 : i32 to index
        %c0_108 = arith.constant 0 : index
        %c0_109 = arith.constant 0 : index
        %178 = vector.load %arg3[%c0_107, %177, %c0_108, %c0_109] : memref<1x9x8x128xf32, #tpu.memory_space<vmem>>, vector<1x1x8x128xf32>
        %179 = vector.shape_cast %178 : vector<1x1x8x128xf32> to vector<8x128xf32>
        %180 = arith.subf %179, %164 : vector<8x128xf32>
        %181 = math.exp %180 : vector<8x128xf32>
        %182 = arith.addf %arg7, %181 : vector<8x128xf32>
        %183 = arith.sitofp %arg6 : i32 to f32
        %184 = vector.broadcast %183 : f32 to vector<8x128xf32>
        %185 = arith.cmpf oeq, %161, %184 : vector<8x128xf32>
        %186 = arith.select %185, %179, %16 : vector<8x128xi1>, vector<8x128xf32>
        %187 = arith.addf %arg8, %186 : vector<8x128xf32>
        scf.yield %182, %187 : vector<8x128xf32>, vector<8x128xf32>
      }
      %c4_i32_102 = arith.constant 4 : i32
      %169 = math.log %168#0 : vector<8x128xf32>
      %170 = arith.addf %164, %169 : vector<8x128xf32>
      %171 = arith.subf %170, %168#1 : vector<8x128xf32>
      %172 = arith.select %3, %171, %16 : vector<8x128xi1>, vector<8x128xf32>
      %c0_103 = arith.constant 0 : index
      %c5_104 = arith.constant 5 : index
      %c0_105 = arith.constant 0 : index
      %c0_106 = arith.constant 0 : index
      %173 = vector.load %arg5[%c0_103, %c5_104, %c0_105, %c0_106] : memref<1x6x8x128xf32, #tpu.memory_space<vmem>>, vector<1x1x8x128xf32>
      %174 = vector.shape_cast %173 : vector<1x1x8x128xf32> to vector<8x128xf32>
      %175 = vector.shape_cast %172 : vector<8x128xf32> to vector<1x1x8x128xf32>
      tpu.vector_store %arg5[%c0_103, %c5_104, %c0_105, %c0_106], %175 {strides = array<i32>} : memref<1x6x8x128xf32, #tpu.memory_space<vmem>>, vector<1x1x8x128xf32>,
    } else {
    }
    %true = arith.constant true
    %36 = arith.xori %33, %true : i1
    %37 = arith.extui %36 : i1 to i32
    %c0_i32_22 = arith.constant 0 : i32
    %38 = arith.cmpi ne, %37, %c0_i32_22 : i32
    scf.if %38 {
      %cst_23 = arith.constant 0.000000e+00 : f32
      %39 = vector.broadcast %cst_23 : f32 to vector<8x128xf32>
      %c0_24 = arith.constant 0 : index
      %c2 = arith.constant 2 : index
      %c0_25 = arith.constant 0 : index
      %c0_26 = arith.constant 0 : index
      %40 = vector.load %arg5[%c0_24, %c2, %c0_25, %c0_26] : memref<1x6x8x128xf32, #tpu.memory_space<vmem>>, vector<1x1x8x128xf32>
      %41 = vector.shape_cast %40 : vector<1x1x8x128xf32> to vector<8x128xf32>
      %42 = vector.shape_cast %39 : vector<8x128xf32> to vector<1x1x8x128xf32>
      tpu.vector_store %arg5[%c0_24, %c2, %c0_25, %c0_26], %42 {strides = array<i32>} : memref<1x6x8x128xf32, #tpu.memory_space<vmem>>, vector<1x1x8x128xf32>,
      %c0_27 = arith.constant 0 : index
      %c3 = arith.constant 3 : index
      %c0_28 = arith.constant 0 : index
      %c0_29 = arith.constant 0 : index
      %43 = vector.load %arg5[%c0_27, %c3, %c0_28, %c0_29] : memref<1x6x8x128xf32, #tpu.memory_space<vmem>>, vector<1x1x8x128xf32>
      %44 = vector.shape_cast %43 : vector<1x1x8x128xf32> to vector<8x128xf32>
      %45 = vector.shape_cast %39 : vector<8x128xf32> to vector<1x1x8x128xf32>
      tpu.vector_store %arg5[%c0_27, %c3, %c0_28, %c0_29], %45 {strides = array<i32>} : memref<1x6x8x128xf32, #tpu.memory_space<vmem>>, vector<1x1x8x128xf32>,
      %c0_30 = arith.constant 0 : index
      %c4 = arith.constant 4 : index
      %c0_31 = arith.constant 0 : index
      %c0_32 = arith.constant 0 : index
      %46 = vector.load %arg5[%c0_30, %c4, %c0_31, %c0_32] : memref<1x6x8x128xf32, #tpu.memory_space<vmem>>, vector<1x1x8x128xf32>
      %47 = vector.shape_cast %46 : vector<1x1x8x128xf32> to vector<8x128xf32>
      %48 = vector.shape_cast %39 : vector<8x128xf32> to vector<1x1x8x128xf32>
      tpu.vector_store %arg5[%c0_30, %c4, %c0_31, %c0_32], %48 {strides = array<i32>} : memref<1x6x8x128xf32, #tpu.memory_space<vmem>>, vector<1x1x8x128xf32>,
      %c0_33 = arith.constant 0 : index
      %c5 = arith.constant 5 : index
      %c0_34 = arith.constant 0 : index
      %c0_35 = arith.constant 0 : index
      %49 = vector.load %arg5[%c0_33, %c5, %c0_34, %c0_35] : memref<1x6x8x128xf32, #tpu.memory_space<vmem>>, vector<1x1x8x128xf32>
      %50 = vector.shape_cast %49 : vector<1x1x8x128xf32> to vector<8x128xf32>
      %51 = vector.shape_cast %39 : vector<8x128xf32> to vector<1x1x8x128xf32>
      tpu.vector_store %arg5[%c0_33, %c5, %c0_34, %c0_35], %51 {strides = array<i32>} : memref<1x6x8x128xf32, #tpu.memory_space<vmem>>, vector<1x1x8x128xf32>,
    } else {
    }
    return
  }
  func.func @transform_0(%arg0: i32, %arg1: i32) -> (i32, i32, i32) {
    %c0_i32 = arith.constant 0 : i32
    %c0_i32_0 = arith.constant 0 : i32
    %c0_i32_1 = arith.constant 0 : i32
    return %arg0, %c0_i32, %c0_i32_0 : i32, i32, i32
  }
  func.func @transform_1(%arg0: i32, %arg1: i32) -> (i32, i32, i32, i32) {
    %c0_i32 = arith.constant 0 : i32
    %c0_i32_0 = arith.constant 0 : i32
    %c0_i32_1 = arith.constant 0 : i32
    return %arg0, %c0_i32, %arg1, %c0_i32_0 : i32, i32, i32, i32
  }
  func.func @transform_2(%arg0: i32, %arg1: i32) -> (i32, i32, i32, i32) {
    %c0_i32 = arith.constant 0 : i32
    %c0_i32_0 = arith.constant 0 : i32
    %c0_i32_1 = arith.constant 0 : i32
    return %arg0, %c0_i32, %arg1, %c0_i32_0 : i32, i32, i32, i32
  }
  func.func @transform_3(%arg0: i32, %arg1: i32) -> (i32, i32, i32, i32) {
    %c1_i32 = arith.constant 1 : i32
    %0 = arith.muli %arg0, %c1_i32 : i32
    %1 = arith.addi %0, %arg1 : i32
    %c0_i32 = arith.constant 0 : i32
    %c0_i32_0 = arith.constant 0 : i32
    %c0_i32_1 = arith.constant 0 : i32
    %c0_i32_2 = arith.constant 0 : i32
    return %1, %c0_i32, %c0_i32_0, %c0_i32_1 : i32, i32, i32, i32
  }
}

</mosaic_0001>

<llo_original>
// kernel: yolo_loss_pallas.1
$region0: #{yolo_loss_pallas.1}
  #allocation0 [shape = 'u32[]', space=smem, size = 0x4, offset = 0x4, fixed_abs, tag = 'smem constant byte address 0x4 - core index']
  #allocation1 [shape = 'u32[72,128]{1,0:T(1,128)}', space=vmem, size = 0x9000, scoped, tag = 'internal scratch']
  %s0 = inlined_call_operand.vmem [shape: f32[3,8,128], index: 0, kind: input, shape index: {}]
  %s1 = inlined_call_operand.vmem [shape: f32[3,9,8,128], index: 1, kind: input, shape index: {}]
  %s2 = inlined_call_operand.vmem [shape: f32[3,6,8,128], index: 2, kind: input, shape index: {}]
  %s3 = inlined_call_operand.vmem [shape: f32[3,6,8,128], index: 3, kind: output, shape index: {}]
  %s4 = sld [smem:[#allocation0]]
  $region67: #{yolo_loss_pallas.1} parent=0
    _
  %s6 = ssub.s32 1, %s4
  %s7 = scalar_select 0, %s6, %s4
  loop: start=0, step=1, limit=5
  $region2: #{yolo_loss_pallas.1} parent=0 // loop_pre_header
    _
  $region3: #{yolo_loss_pallas.1} parent=0 // loop_header
    %s9 = sphi 0, %s13
    %p10 = scmp.ge.s32.totalorder %s9, 5
    %s16 = sphi 0, %s28
    %s17 = sphi 0, %s24
    %s18 = sphi 0, %s16
    %s19 = sphi 0, %s17
    %s20 = sphi 0, %s18
    %s21 = sphi 0, %s19
    %s31 = sphi 0, %s33
    %s34 = sphi 0, %s31
    %s35 = sphi 0, %s34
    %s51 = sphi 0, %s35
    %s59 = sphi 0, %s61
    %s62 = sphi 0, %s59
    %s63 = sphi 0, %s62
    %s79 = sphi 0, %s63
    %s87 = sphi 0, %s89
    %s90 = sphi 0, %s87
    %s91 = sphi 0, %s90
    %s107 = sphi 0, %s91
    %s115 = sphi 0, %s117
    %s118 = sphi 0, %s115
    %s119 = sphi 0, %s118
    %s135 = sphi 0, %s119
  $region4: #{yolo_loss_pallas.1} parent=0 // loop_header_branch
    %12 = sbr.rel (%p10) target = $region8
  $region5: #{yolo_loss_pallas.1} parent=0 // loop_body
    %s14 = ssub.s32 %s9, 1
    %s15 = ssub.s32 %s9, 2
    %s22 = sadd.s32 1, %s17
    %p23 = scmp.ge.s32.totalorder %s22, 1
    %s24 = scalar_select %p23, 0, %s22
    %s25 = sadd.s32 1, %s16
    %s26 = scalar_select %p23, %s25, %s16
    %p27 = scmp.ge.s32.totalorder %s26, 3
    %s28 = scalar_select %p27, 0, %s26
    %s29 = ssub.s32 %s16, %s28
    %p30 = scmp.eq.s32.totalorder %s29, 0
    %s32 = sadd.s32 %s31, 1
    %s33 = scalar_select %p30, %s31, %s32
    %p36 = pneg %p30
    %p37 = scmp.eq.s32.totalorder %s9, 2
    %p38 = por %p36, %p37
    %p39 = scmp.ne.s32.totalorder %s31, %s34
    %p40 = scmp.eq.s32.totalorder %s9, 0
    %p41 = por %p39, %p40
    %p42 = scmp.ne.s32.totalorder %s31, %s34
    %p43 = scmp.eq.s32.totalorder %s14, 2
    %p44 = por %p42, %p43
    %p45 = scmp.ne.s32.totalorder %s34, %s35
    %p46 = scmp.eq.s32.totalorder %s14, 0
    %p47 = por %p45, %p46
    %p48 = scmp.ne.s32.totalorder %s34, %s35
    %p49 = scmp.eq.s32.totalorder %s15, 2
    %p50 = por %p48, %p49
    %p52 = scmp.ne.s32.totalorder %s35, %s51
    %p53 = scmp.eq.s32.totalorder %s15, 0
    %p54 = por %p52, %p53
    %s55 = ssub.s32 %s16, %s28
    %s56 = ssub.s32 %s17, %s24
    %s57 = sor.u32 %s55, %s56
    %p58 = scmp.eq.s32.totalorder %s57, 0
    %s60 = sadd.s32 %s59, 1
    %s61 = scalar_select %p58, %s59, %s60
    %p64 = pneg %p58
    %p65 = scmp.eq.s32.totalorder %s9, 2
    %p66 = por %p64, %p65
    %p67 = scmp.ne.s32.totalorder %s59, %s62
    %p68 = scmp.eq.s32.totalorder %s9, 0
    %p69 = por %p67, %p68
    %p70 = scmp.ne.s32.totalorder %s59, %s62
    %p71 = scmp.eq.s32.totalorder %s14, 2
    %p72 = por %p70, %p71
    %p73 = scmp.ne.s32.totalorder %s62, %s63
    %p74 = scmp.eq.s32.totalorder %s14, 0
    %p75 = por %p73, %p74
    %p76 = scmp.ne.s32.totalorder %s62, %s63
    %p77 = scmp.eq.s32.totalorder %s15, 2
    %p78 = por %p76, %p77
    %p80 = scmp.ne.s32.totalorder %s63, %s79
    %p81 = scmp.eq.s32.totalorder %s15, 0
    %p82 = por %p80, %p81
    %s83 = ssub.s32 %s16, %s28
    %s84 = ssub.s32 %s17, %s24
    %s85 = sor.u32 %s83, %s84
    %p86 = scmp.eq.s32.totalorder %s85, 0
    %s88 = sadd.s32 %s87, 1
    %s89 = scalar_select %p86, %s87, %s88
    %p92 = pneg %p86
    %p93 = scmp.eq.s32.totalorder %s9, 2
    %p94 = por %p92, %p93
    %p95 = scmp.ne.s32.totalorder %s87, %s90
    %p96 = scmp.eq.s32.totalorder %s9, 0
    %p97 = por %p95, %p96
    %p98 = scmp.ne.s32.totalorder %s87, %s90
    %p99 = scmp.eq.s32.totalorder %s14, 2
    %p100 = por %p98, %p99
    %p101 = scmp.ne.s32.totalorder %s90, %s91
    %p102 = scmp.eq.s32.totalorder %s14, 0
    %p103 = por %p101, %p102
    %p104 = scmp.ne.s32.totalorder %s90, %s91
    %p105 = scmp.eq.s32.totalorder %s15, 2
    %p106 = por %p104, %p105
    %p108 = scmp.ne.s32.totalorder %s91, %s107
    %p109 = scmp.eq.s32.totalorder %s15, 0
    %p110 = por %p108, %p109
    %s111 = sadd.s32 %s16, %s17
    %s112 = sadd.s32 %s28, %s24
    %s113 = ssub.s32 %s111, %s112
    %p114 = scmp.eq.s32.totalorder %s113, 0
    %s116 = sadd.s32 %s115, 1
    %s117 = scalar_select %p114, %s115, %s116
    %p120 = pneg %p114
    %p121 = scmp.eq.s32.totalorder %s9, 2
    %p122 = por %p120, %p121
    %p123 = scmp.ne.s32.totalorder %s115, %s118
    %p124 = scmp.eq.s32.totalorder %s9, 0
    %p125 = por %p123, %p124
    %p126 = scmp.ne.s32.totalorder %s115, %s118
    %p127 = scmp.eq.s32.totalorder %s14, 2
    %p128 = por %p126, %p127
    %p129 = scmp.ne.s32.totalorder %s118, %s119
    %p130 = scmp.eq.s32.totalorder %s14, 0
    %p131 = por %p129, %p130
    %p132 = scmp.ne.s32.totalorder %s118, %s119
    %p133 = scmp.eq.s32.totalorder %s15, 2
    %p134 = por %p132, %p133
    %p136 = scmp.ne.s32.totalorder %s119, %s135
    %p137 = scmp.eq.s32.totalorder %s15, 0
    %p138 = por %p136, %p137
    %p139 = scmp.le.s32.totalorder 1, %s9
    %p140 = scmp.lt.s32.totalorder %s9, 4
    %p141 = pnand %p139, %p140
    %p142 = pneg %p141
    // Predicated region
    $region9: #{yolo_loss_pallas.1} parent=5 // pred_check
      _
    $region10: #{yolo_loss_pallas.1} parent=5 // pred_check_branch
      %144 = sbr.rel (%p141) target = $region12
    $region11: #{yolo_loss_pallas.1} parent=5 // pred_region
      %s145 = ssub.s32 %s9, 1
    $region12: #{yolo_loss_pallas.1} parent=5 // pred_fallthru
      _
    %p146 = scmp.lt.s32.totalorder %s9, 3
    // Predicated region
    $region13: #{yolo_loss_pallas.1} parent=5 // pred_check
      %p147 = pneg %p146
    $region14: #{yolo_loss_pallas.1} parent=5 // pred_check_branch
      %149 = sbr.rel (%p147) target = $region16
    $region15: #{yolo_loss_pallas.1} parent=5 // pred_region
      // Predicated region
      $region17: #{yolo_loss_pallas.1} parent=15 // pred_check
        %p150 = pneg %p41
      $region18: #{yolo_loss_pallas.1} parent=15 // pred_check_branch
        %152 = sbr.rel (%p150) target = $region20
      $region19: #{yolo_loss_pallas.1} parent=15 // pred_region
        %p153 = scmp.lt.s32.totalorder %s16, 2
        %s154 = scalar_select %p153, %s16, 2
        %s155 = smul.addr %s154, 8
        %s156 = scalar_lea.vmem %s0, %s155
      $region20: #{yolo_loss_pallas.1} parent=15 // pred_fallthru
        _
      // Predicated region
      $region21: #{yolo_loss_pallas.1} parent=15 // pred_check
        %p157 = pneg %p69
      $region22: #{yolo_loss_pallas.1} parent=15 // pred_check_branch
        %159 = sbr.rel (%p157) target = $region24
      $region23: #{yolo_loss_pallas.1} parent=15 // pred_region
        %p160 = scmp.lt.s32.totalorder %s16, 2
        %s161 = scalar_select %p160, %s16, 2
        %p162 = scmp.lt.s32.totalorder %s17, 0
        %s163 = scalar_select %p162, %s17, 0
        %s164 = smul.addr %s161, 9
        %s165 = sadd.s32 %s163, %s164
        %s166 = smul.addr %s165, 8
        %s167 = scalar_lea.vmem %s1, %s166
      $region24: #{yolo_loss_pallas.1} parent=15 // pred_fallthru
        _
      // Predicated region
      $region25: #{yolo_loss_pallas.1} parent=15 // pred_check
        %p168 = pneg %p97
      $region26: #{yolo_loss_pallas.1} parent=15 // pred_check_branch
        %170 = sbr.rel (%p168) target = $region28
      $region27: #{yolo_loss_pallas.1} parent=15 // pred_region
        %p171 = scmp.lt.s32.totalorder %s16, 2
        %s172 = scalar_select %p171, %s16, 2
        %p173 = scmp.lt.s32.totalorder %s17, 0
        %s174 = scalar_select %p173, %s17, 0
        %s175 = smul.addr %s172, 6
        %s176 = sadd.s32 %s174, %s175
        %s177 = smul.addr %s176, 8
        %s178 = scalar_lea.vmem %s2, %s177
      $region28: #{yolo_loss_pallas.1} parent=15 // pred_fallthru
        _
    $region16: #{yolo_loss_pallas.1} parent=5 // pred_fallthru
      _
    %p179 = scmp.le.s32.totalorder 1, %s9
    %p180 = scmp.lt.s32.totalorder %s9, 4
    %p181 = pnand %p179, %p180
    %p182 = pneg %p181
    // Predicated region
    $region29: #{yolo_loss_pallas.1} parent=5 // pred_check
      _
    $region30: #{yolo_loss_pallas.1} parent=5 // pred_check_branch
      %184 = sbr.rel (%p181) target = $region32
    $region31: #{yolo_loss_pallas.1} parent=5 // pred_region
      %s185 = ssub.s32 %s9, 1
      %p186 = scmp.lt.s32.totalorder %s18, 2
      %s187 = scalar_select %p186, %s18, 2
      %s188 = smul.addr %s187, 8
      %s189 = scalar_lea.vmem %s0, %s188
      %p190 = pneg %p47
      %p191 = pneg %p44
      %p192 = scmp.lt.s32.totalorder %s18, 2
      %s193 = scalar_select %p192, %s18, 2
      %p194 = scmp.lt.s32.totalorder %s19, 0
      %s195 = scalar_select %p194, %s19, 0
      %s196 = smul.addr %s193, 9
      %s197 = sadd.s32 %s195, %s196
      %s198 = smul.addr %s197, 8
      %s199 = scalar_lea.vmem %s1, %s198
      %p200 = pneg %p75
      %p201 = pneg %p72
      %p202 = scmp.lt.s32.totalorder %s18, 2
      %s203 = scalar_select %p202, %s18, 2
      %p204 = scmp.lt.s32.totalorder %s19, 0
      %s205 = scalar_select %p204, %s19, 0
      %s206 = smul.addr %s203, 6
      %s207 = sadd.s32 %s205, %s206
      %s208 = smul.addr %s207, 8
      %s209 = scalar_lea.vmem %s2, %s208
      %p210 = pneg %p103
      %p211 = pneg %p100
      %p212 = pneg %p131
      %p213 = pneg %p128
      %s214 = sadd.s32 %s18, %s19
      %p215 = scmp.lt.s32.totalorder %s214, 2
      %s216 = scalar_select %p215, %s214, 2
      %s217 = smul.addr %s216, 6
      %s218 = smul.addr %s217, 8
      %s219 = scalar_lea.vmem %s3, %s218
      %p220 = scmp.lt.s32.totalorder %s18, 2
      %s221 = scalar_select %p220, %s18, 2
      %s222 = smul.addr %s221, 8
      %s223 = scalar_lea.vmem %s0, %s222
      %p224 = scmp.lt.s32.totalorder %s18, 2
      %s225 = scalar_select %p224, %s18, 2
      %p226 = scmp.lt.s32.totalorder %s19, 0
      %s227 = scalar_select %p226, %s19, 0
      %s228 = smul.addr %s225, 9
      %s229 = sadd.s32 %s227, %s228
      %s230 = smul.addr %s229, 8
      %s231 = scalar_lea.vmem %s1, %s230
      %p232 = scmp.lt.s32.totalorder %s18, 2
      %s233 = scalar_select %p232, %s18, 2
      %p234 = scmp.lt.s32.totalorder %s19, 0
      %s235 = scalar_select %p234, %s19, 0
      %s236 = smul.addr %s233, 6
      %s237 = sadd.s32 %s235, %s236
      %s238 = smul.addr %s237, 8
      %s239 = scalar_lea.vmem %s2, %s238
      %s240 = sadd.s32 %s18, %s19
      %p241 = scmp.lt.s32.totalorder %s240, 2
      %s242 = scalar_select %p241, %s240, 2
      %s243 = smul.addr %s242, 6
      %s244 = smul.addr %s243, 8
      %s245 = scalar_lea.vmem %s3, %s244
      %s246 = sadd.s32 %s18, %s19
      %v247 = vld [vmem:[%s239] sm:$0xff]
      %vm248 = vcmp.eq.f32.partialorder %v247, 1.0
      %vm249 = vcmp.eq.f32.partialorder %v247, 0.0
      %v250 = vld [vmem:[%s231] sm:$0xff]
      %v251 = vmax.f32 %v250, 0.0
      %v252 = vand.u32 2147483647, %v250
      %v253 = vsub.f32 0.0, %v252
      %v254 = vmul.f32 %v253, 1.442695
      %v255 = vpow.pop %v254
      %v256 = vadd.f32 %v255, 1.0
      %v257 = vlog2.pop %v256
      %v258 = vmul.f32 %v257, 0.6931472
      %v259 = vmul.f32 -0.5, %v255
      %v260 = vadd.f32 %v259, 1.0
      %v261 = vmul.f32 %v260, %v255
      %v262 = vand.u32 2147483647, %v255
      %vm263 = vcmp.lt.f32.partialorder %v262, 0.0004427343
      %v264 = vsel %vm263, %v261, %v258
      %v265 = vadd.f32 %v251, %v264
      %v266 = vsel %vm249, %v265, 0.0
      %267 = vst [vmem:[%s245] sm:$0xff] %v266
      %v268 = vsel %vm249, 1, 0
      %v269 = vcvt.s32.f32 %v268
      %s270 = scalar_lea.vmem %s245, 8
      %271 = vst [vmem:[%s270] sm:$0xff] %v269
      %v272 = vsel %vm248, 1.0, 0.0
      %273 = vmax.xlane.f32.xlu0 %v272
      %v274 = vpop.xlane.xlu0 %273
      %v275 = vrot.slane %v274, 4
      %v276 = vmax.f32 %v274, %v275
      %v277 = vrot.slane %v276, 2
      %v278 = vmax.f32 %v276, %v277
      %v279 = vrot.slane %v278, 1
      %v280 = vmax.f32 %v278, %v279
      %s281 = vtos %v280
      %p282 = scmp.gt.f32.partialorder %s281, 0.0
      // Predicated region
      $region33: #{yolo_loss_pallas.1} parent=31 // pred_check
        %p283 = pneg %p282
      $region34: #{yolo_loss_pallas.1} parent=31 // pred_check_branch
        %285 = sbr.rel (%p283) target = $region36
      $region35: #{yolo_loss_pallas.1} parent=31 // pred_region
        %v286 = vld [vmem:[%s223] sm:$0x1]
        %v287 = vld [vmem:[%s223 + $0x1] sm:$0x1]
        %v288 = vld [vmem:[%s223 + $0x2] sm:$0x1]
        %v289 = vld [vmem:[%s223 + $0x3] sm:$0x1]
        %s290 = scalar_lea.vmem %s231, 8
        %v291 = vld [vmem:[%s290] sm:$0xff]
        %v292 = vxor.u32 %v291, 2147483648
        %v293 = vmul.f32 %v292, 1.442695
        %v294 = vpow.pop %v293
        %v295 = vadd.f32 %v294, 1.0
        %v296 = vrcp.pop %v295
        %v297 = vmul.f32 %v295, %v296
        %v298 = vsub.f32 1.0, %v297
        %v299 = vmul.f32 %v296, %v298
        %v300 = vadd.f32 %v296, %v299
        %vm301 = vweird.f32 %v295
        %vm302 = vweird.f32 %v296
        %vm303 = vmor %vm301, %vm302
        %v304 = vsel %vm303, %v296, %v300
        %v305 = vand.u32 2147483647, %v295
        %vm306 = vcmp.eq.f32.partialorder %v305, 8.507059e+37
        %v307 = vand.u32 %v295, 2147483648
        %v308 = vor.u32 1.1754944e-38, %v307
        %v309 = vsel %vm306, %v308, %v304
        %v310 = vmul.f32 1.0, %v309
        %s311 = scalar_lea.vmem %s231, 16
        %v312 = vld [vmem:[%s311] sm:$0xff]
        %v313 = vxor.u32 %v312, 2147483648
        %v314 = vmul.f32 %v313, 1.442695
        %v315 = vpow.pop %v314
        %v316 = vadd.f32 %v315, 1.0
        %v317 = vrcp.pop %v316
        %v318 = vmul.f32 %v316, %v317
        %v319 = vsub.f32 1.0, %v318
        %v320 = vmul.f32 %v317, %v319
        %v321 = vadd.f32 %v317, %v320
        %vm322 = vweird.f32 %v316
        %vm323 = vweird.f32 %v317
        %vm324 = vmor %vm322, %vm323
        %v325 = vsel %vm324, %v317, %v321
        %v326 = vand.u32 2147483647, %v316
        %vm327 = vcmp.eq.f32.partialorder %v326, 8.507059e+37
        %v328 = vand.u32 %v316, 2147483648
        %v329 = vor.u32 1.1754944e-38, %v328
        %v330 = vsel %vm327, %v329, %v325
        %v331 = vmul.f32 1.0, %v330
        %s332 = scalar_lea.vmem %s231, 24
        %v333 = vld [vmem:[%s332] sm:$0xff]
        %s334 = scalar_lea.vmem %s231, 32
        %v335 = vld [vmem:[%s334] sm:$0xff]
        %v336 = vmul.f32 %v333, 1.442695
        %v337 = vpow.pop %v336
        %v338 = vperm.slane %v286, 0
        %v339 = vmul.f32 %v337, %v338
        %v340 = vmul.f32 %v335, 1.442695
        %v341 = vpow.pop %v340
        %v342 = vperm.slane %v287, 0
        %v343 = vmul.f32 %v341, %v342
        %s344 = scalar_lea.vmem %s239, 8
        %v345 = vld [vmem:[%s344] sm:$0xff]
        %s346 = scalar_lea.vmem %s239, 16
        %v347 = vld [vmem:[%s346] sm:$0xff]
        %s348 = scalar_lea.vmem %s239, 24
        %v349 = vld [vmem:[%s348] sm:$0xff]
        %s350 = scalar_lea.vmem %s239, 32
        %v351 = vld [vmem:[%s350] sm:$0xff]
        %v352 = vmul.f32 %v339, 0.5
        %v353 = vadd.f32 %v310, %v352
        %v354 = vmul.f32 %v349, 0.5
        %v355 = vadd.f32 %v345, %v354
        %v356 = vmin.f32 %v353, %v355
        %v357 = vsub.f32 %v310, %v352
        %v358 = vsub.f32 %v345, %v354
        %v359 = vmax.f32 %v357, %v358
        %v360 = vsub.f32 %v356, %v359
        %v361 = vmax.f32 %v360, 0.0
        %v362 = vmul.f32 %v343, 0.5
        %v363 = vadd.f32 %v331, %v362
        %v364 = vmul.f32 %v351, 0.5
        %v365 = vadd.f32 %v347, %v364
        %v366 = vmin.f32 %v363, %v365
        %v367 = vsub.f32 %v331, %v362
        %v368 = vsub.f32 %v347, %v364
        %v369 = vmax.f32 %v367, %v368
        %v370 = vsub.f32 %v366, %v369
        %v371 = vmax.f32 %v370, 0.0
        %v372 = vmul.f32 %v361, %v371
        %v373 = vmul.f32 %v339, %v343
        %v374 = vand.u32 2147483647, %v373
        %v375 = vmul.f32 %v349, %v351
        %v376 = vand.u32 2147483647, %v375
        %v377 = vadd.f32 %v374, %v376
        %v378 = vsub.f32 %v377, %v372
        %v379 = vadd.f32 %v378, 1e-06
        %v380 = vrcp.pop %v379
        %v381 = vmul.f32 %v372, %v380
        %v382 = vmul.f32 %v250, %v381
        %v383 = vsub.f32 %v265, %v382
        %v384 = vsel %vm248, %v383, 0.0
        %s385 = scalar_lea.vmem %s245, 16
        %386 = vst [vmem:[%s385] sm:$0xff] %v384
        %v387 = vsel %vm248, 1, 0
        %v388 = vcvt.s32.f32 %v387
        %s389 = scalar_lea.vmem %s245, 24
        %390 = vst [vmem:[%s389] sm:$0xff] %v388
        %v391 = vsub.f32 %v310, %v345
        %v392 = vsub.f32 %v331, %v347
        %v393 = vperm.slane %v288, 0
        %v394 = vmul.f32 %v349, %v393
        %v395 = vadd.f32 %v394, 1e-16
        %v396 = vlog2.pop %v395
        %v397 = vmul.f32 %v396, 0.6931472
        %v398 = vsub.f32 %v333, %v397
        %v399 = vperm.slane %v289, 0
        %v400 = vmul.f32 %v351, %v399
        %v401 = vadd.f32 %v400, 1e-16
        %v402 = vlog2.pop %v401
        %v403 = vmul.f32 %v402, 0.6931472
        %v404 = vsub.f32 %v335, %v403
        %v405 = vmul.f32 %v391, %v391
        %v406 = vmul.f32 %v392, %v392
        %v407 = vadd.f32 %v405, %v406
        %v408 = vmul.f32 %v398, %v398
        %v409 = vadd.f32 %v407, %v408
        %v410 = vmul.f32 %v404, %v404
        %v411 = vadd.f32 %v409, %v410
        %v412 = vsel %vm248, %v411, 0.0
        %s413 = scalar_lea.vmem %s245, 32
        %414 = vst [vmem:[%s413] sm:$0xff] %v412
        %s415 = scalar_lea.vmem %s239, 40
        %v416 = vld [vmem:[%s415] sm:$0xff]
        loop: start=0, step=1, limit=4
        $region37: #{yolo_loss_pallas.1} parent=35 // loop_pre_header
          _
        $region38: #{yolo_loss_pallas.1} parent=35 // loop_header
          %s418 = sphi 0, %s422
          %p419 = scmp.ge.s32.totalorder %s418, 4
          %v423 = vphi -inf, %v428
        $region39: #{yolo_loss_pallas.1} parent=35 // loop_header_branch
          %421 = sbr.rel (%p419) target = $region43
        $region40: #{yolo_loss_pallas.1} parent=35 // loop_body
          %s424 = sadd.s32 %s418, 5
          %s425 = smul.u32 %s424, 8
          %s426 = scalar_lea.vmem %s231, %s425
          %v427 = vld [vmem:[%s426] sm:$0xff]
          %v428 = vmax.f32 %v423, %v427
        $region41: #{yolo_loss_pallas.1} parent=35 // loop_footer
          %s422 = sadd.s32 1, %s418
        $region42: #{yolo_loss_pallas.1} parent=35 // loop_footer_branch
          %417 = sbr.rel target = $region38
        $region43: #{yolo_loss_pallas.1} parent=35 // loop_exit
          _
        loop: start=0, step=1, limit=4
        $region44: #{yolo_loss_pallas.1} parent=35 // loop_pre_header
          _
        $region45: #{yolo_loss_pallas.1} parent=35 // loop_header
          %s430 = sphi 0, %s434
          %p431 = scmp.ge.s32.totalorder %s430, 4
          %v435 = vphi 0.0, %v444
          %v436 = vphi 0.0, %v449
        $region46: #{yolo_loss_pallas.1} parent=35 // loop_header_branch
          %433 = sbr.rel (%p431) target = $region50
        $region47: #{yolo_loss_pallas.1} parent=35 // loop_body
          %s437 = sadd.s32 %s430, 5
          %s438 = smul.u32 %s437, 8
          %s439 = scalar_lea.vmem %s231, %s438
          %v440 = vld [vmem:[%s439] sm:$0xff]
          %v441 = vsub.f32 %v440, %v423
          %v442 = vmul.f32 %v441, 1.442695
          %v443 = vpow.pop %v442
          %v444 = vadd.f32 %v435, %v443
          %s445 = scvt.s32.f32 %s430
          %v446 = vstv %s445
          %vm447 = vcmp.eq.f32.partialorder %v416, %v446
          %v448 = vsel %vm447, %v440, 0.0
          %v449 = vadd.f32 %v436, %v448
        $region48: #{yolo_loss_pallas.1} parent=35 // loop_footer
          %s434 = sadd.s32 1, %s430
        $region49: #{yolo_loss_pallas.1} parent=35 // loop_footer_branch
          %429 = sbr.rel target = $region45
        $region50: #{yolo_loss_pallas.1} parent=35 // loop_exit
          _
        %v450 = vlog2.pop %v435
        %v451 = vmul.f32 %v450, 0.6931472
        %v452 = vadd.f32 %v423, %v451
        %v453 = vsub.f32 %v452, %v436
        %v454 = vsel %vm248, %v453, 0.0
        %s455 = scalar_lea.vmem %s245, 40
        %456 = vst [vmem:[%s455] sm:$0xff] %v454
      $region36: #{yolo_loss_pallas.1} parent=31 // pred_fallthru
        _
      %p457 = pneg %p282
      // Predicated region
      $region51: #{yolo_loss_pallas.1} parent=31 // pred_check
        _
      $region52: #{yolo_loss_pallas.1} parent=31 // pred_check_branch
        %459 = sbr.rel (%p282) target = $region54
      $region53: #{yolo_loss_pallas.1} parent=31 // pred_region
        %s460 = scalar_lea.vmem %s245, 16
        %461 = vst [vmem:[%s460] sm:$0xff] 0.0
        %s462 = scalar_lea.vmem %s245, 24
        %463 = vst [vmem:[%s462] sm:$0xff] 0.0
        %s464 = scalar_lea.vmem %s245, 32
        %465 = vst [vmem:[%s464] sm:$0xff] 0.0
        %s466 = scalar_lea.vmem %s245, 40
        %467 = vst [vmem:[%s466] sm:$0xff] 0.0
      $region54: #{yolo_loss_pallas.1} parent=31 // pred_fallthru
        _
      %s468 = sadd.s32 %s18, %s19
      %p469 = scmp.lt.s32.totalorder %s468, 2
      %s470 = scalar_select %p469, %s468, 2
      %s471 = smul.addr %s470, 6
      %s472 = smul.addr %s471, 8
      %s473 = scalar_lea.vmem %s3, %s472
      // Predicated region
      $region55: #{yolo_loss_pallas.1} parent=31 // pred_check
        %p474 = pneg %p128
      $region56: #{yolo_loss_pallas.1} parent=31 // pred_check_branch
        %476 = sbr.rel (%p474) target = $region58
      $region57: #{yolo_loss_pallas.1} parent=31 // pred_region
        %s477 = sadd.s32 %s18, %s19
      $region58: #{yolo_loss_pallas.1} parent=31 // pred_fallthru
        _
    $region32: #{yolo_loss_pallas.1} parent=5 // pred_fallthru
      _
    %p478 = scmp.le.s32.totalorder 2, %s9
    // Predicated region
    $region59: #{yolo_loss_pallas.1} parent=5 // pred_check
      %p479 = pneg %p478
    $region60: #{yolo_loss_pallas.1} parent=5 // pred_check_branch
      %481 = sbr.rel (%p479) target = $region62
    $region61: #{yolo_loss_pallas.1} parent=5 // pred_region
      %s482 = ssub.s32 %s9, 2
      // Predicated region
      $region63: #{yolo_loss_pallas.1} parent=61 // pred_check
        %p483 = pneg %p134
      $region64: #{yolo_loss_pallas.1} parent=61 // pred_check_branch
        %485 = sbr.rel (%p483) target = $region66
      $region65: #{yolo_loss_pallas.1} parent=61 // pred_region
        %s486 = sadd.s32 %s20, %s21
        %p487 = scmp.lt.s32.totalorder %s486, 2
        %s488 = scalar_select %p487, %s486, 2
        %s489 = smul.addr %s488, 6
        %s490 = smul.addr %s489, 8
        %s491 = scalar_lea.vmem %s3, %s490
      $region66: #{yolo_loss_pallas.1} parent=61 // pred_fallthru
        _
    $region62: #{yolo_loss_pallas.1} parent=5 // pred_fallthru
      _
  $region6: #{yolo_loss_pallas.1} parent=0 // loop_footer
    %s13 = sadd.s32 1, %s9
  $region7: #{yolo_loss_pallas.1} parent=0 // loop_footer_branch
    %8 = sbr.rel target = $region3
  $region8: #{yolo_loss_pallas.1} parent=0 // loop_exit
    _

</llo_original>
